<compile_context>
chip_gen: v6e
topology: v6e:2x2x1
jax: 0.10.0
libtpu: 0.0.40
codegen_flags: <defaults>
</compile_context>

<pallas_src>
import jax
import jax.numpy as jnp
from jax.experimental import pallas as pl
from jax.experimental.pallas import tpu as pltpu


D_IN = 100        # latent dim (un-padded in HBM)
D_IN_PAD = 128    # padded inside the kernel (zero lanes)
D_HID = 128       # hidden 32/64/128 all zero-padded to 128
D_OUT = 784       # 28*28, stored un-padded (masked store on the last 16 lanes)
D_OUT_PAD = 896   # 7*128, used only inside the kernel for an aligned matmul


def _leaky_relu(x, slope=0.2):
    # leaky_relu(x, 0.2) == max(x, 0.2*x)  (mul + max instead of cmp + select)
    return jnp.maximum(x, slope * x)


def generator_kernel(x_ref,
                     w0_ref, b0_ref,
                     w1_ref, b1_ref,
                     w2_ref, b2_ref,
                     w3_ref, b3_ref,
                     out_ref,
                     xb_ref):
    """Fused 4-layer MLP on one (TB, .) batch tile.

    Matmuls run in bf16 on the MXU with f32 accumulation; bias-add / leaky_relu
    stay f32; final tanh runs in bf16 and is stored as bf16.
    """
    # In-kernel zero-pad of the latent dim 100 -> 128 (+ bf16 cast) so the
    # first matmul is fully lane-aligned.  Padded lanes are exactly zero and
    # w0's padded rows are zero, so the math is unchanged.
    xb_ref[...] = jnp.zeros_like(xb_ref)
    xb_ref[:, :D_IN] = x_ref[...].astype(jnp.bfloat16)
    x = xb_ref[...]                                                   # (TB,128) bf16

    h = jnp.dot(x, w0_ref[...], preferred_element_type=jnp.float32)   # (TB,128) f32
    h = _leaky_relu(h + b0_ref[...])
    # dropout(0.3) -> identity in eval mode

    h = jnp.dot(h.astype(jnp.bfloat16), w1_ref[...],
                preferred_element_type=jnp.float32)                   # (TB,128)
    h = _leaky_relu(h + b1_ref[...])

    h = jnp.dot(h.astype(jnp.bfloat16), w2_ref[...],
                preferred_element_type=jnp.float32)                   # (TB,128)
    h = _leaky_relu(h + b2_ref[...])

    h = jnp.dot(h.astype(jnp.bfloat16), w3_ref[...],
                preferred_element_type=jnp.float32)                   # (TB,896) f32
    y = jnp.tanh((h + b3_ref[...]).astype(jnp.bfloat16))              # bf16 tanh
    out_ref[...] = y[:, :D_OUT]                                       # drop pad cols


def _pad2d(a, rows, cols):
    return jnp.pad(a, ((0, rows - a.shape[0]), (0, cols - a.shape[1])))


def prepare_params(params):
    """One-time prep (hoisted out of the hot loop): zero-pad to lane-dense
    shapes and cast weights to bf16. Biases stay f32."""
    (w0, b0), (w1, b1), (w2, b2), (w3, b3) = params
    w0p = _pad2d(w0, D_IN_PAD, D_HID).astype(jnp.bfloat16)    # (128,128)
    w1p = _pad2d(w1, D_HID, D_HID).astype(jnp.bfloat16)       # (128,128)
    w2p = _pad2d(w2, D_HID, D_HID).astype(jnp.bfloat16)       # (128,128)
    w3p = _pad2d(w3, D_HID, D_OUT_PAD).astype(jnp.bfloat16)   # (128,896)
    b0p = _pad2d(b0, 1, D_HID)                                # f32 (1,128)
    b1p = _pad2d(b1, 1, D_HID)
    b2p = _pad2d(b2, 1, D_HID)
    b3p = _pad2d(b3, 1, D_OUT_PAD)                            # f32 (1,896)
    return (w0p, b0p, w1p, b1p, w2p, b2p, w3p, b3p)


def _choose_tb(b8, tb_max):
    """Largest multiple-of-8 tile that divides the (8-rounded) batch exactly
    (zero batch padding => zero wasted writeback), capped at tb_max, and
    preferring >=2 grid steps so v7x megacore gets both TensorCores busy."""
    tb_max = max(8, (tb_max // 8) * 8)
    hi = min(tb_max, b8)
    divisors = [t for t in range(8, hi + 1, 8) if b8 % t == 0]
    multi = [t for t in divisors if b8 // t >= 2]
    return max(multi) if multi else max(divisors)


def generator_forward(x, prepped_params, *, tb_max=2048):
    """x: (B, 100) f32.  prepped_params: output of prepare_params.
    Returns (B, 28, 28) bf16 (cast to f32 caller-side only if needed)."""
    B, d = x.shape
    assert d == D_IN, d
    w0p, b0p, w1p, b1p, w2p, b2p, w3p, b3p = prepped_params

    B8 = ((B + 7) // 8) * 8
    TB = _choose_tb(B8, tb_max)
    Bp = B8                       # TB divides B8 exactly by construction
    grid = (Bp // TB,)

    # Only batch-row padding (<= 7 rows) ever happens; no latent pad / cast
    # pass in the wrapper — that is done inside the kernel.
    xp = x if Bp == B else jnp.pad(x, ((0, Bp - B), (0, 0)))

    const = lambda i: (0, 0)      # weights/biases resident across grid steps
    in_specs = [
        pl.BlockSpec((TB, D_IN), lambda i: (i, 0)),          # x tile (f32, unpadded)
        pl.BlockSpec((D_IN_PAD, D_HID), const),              # w0
        pl.BlockSpec((1, D_HID), const),                     # b0
        pl.BlockSpec((D_HID, D_HID), const),                 # w1
        pl.BlockSpec((1, D_HID), const),                     # b1
        pl.BlockSpec((D_HID, D_HID), const),                 # w2
        pl.BlockSpec((1, D_HID), const),                     # b2
        pl.BlockSpec((D_HID, D_OUT_PAD), const),             # w3
        pl.BlockSpec((1, D_OUT_PAD), const),                 # b3
    ]
    out_spec = pl.BlockSpec((TB, D_OUT), lambda i: (i, 0))

    # Advisory cost estimate so XLA schedules around the call sensibly.
    matmul_flops = 2 * Bp * (D_IN_PAD * D_HID + 2 * D_HID * D_HID
                             + D_HID * D_OUT_PAD)
    weight_bytes = 2 * (3 * D_HID * D_HID + D_HID * D_OUT_PAD) \
        + 4 * (3 * D_HID + D_OUT_PAD)
    cost = pl.CostEstimate(
        flops=matmul_flops,
        transcendentals=Bp * D_OUT_PAD,
        bytes_accessed=Bp * D_IN * 4 + weight_bytes + Bp * D_OUT * 2,
    )

    out_flat = pl.pallas_call(
        generator_kernel,
        out_shape=jax.ShapeDtypeStruct((Bp, D_OUT), jnp.bfloat16),
        grid=grid,
        in_specs=in_specs,
        out_specs=out_spec,
        scratch_shapes=[pltpu.VMEM((TB, D_IN_PAD), jnp.bfloat16)],
        compiler_params=pltpu.CompilerParams(
            dimension_semantics=("parallel",)),
        cost_estimate=cost,
    )(xp, w0p, b0p, w1p, b1p, w2p, b2p, w3p, b3p)

    out = out_flat if Bp == B else out_flat[:B]
    return out.reshape(B, 28, 28)


def init_params(key):
    """Deterministic init mirroring nn.Linear shapes (stored as (in, out))."""
    dims = [(100, 32), (32, 64), (64, 128), (128, 784)]
    params = []
    for i, (fan_in, fan_out) in enumerate(dims):
        kw, kb = jax.random.split(jax.random.fold_in(key, i))
        bound = 1.0 / jnp.sqrt(fan_in)
        w = jax.random.uniform(kw, (fan_in, fan_out), jnp.float32,
                               minval=-bound, maxval=bound)
        b = jax.random.uniform(kb, (1, fan_out), jnp.float32,
                               minval=-bound, maxval=bound)
        params.append((w, b))
    return params


def generator_reference(x, params):
    """Pure-JAX f32 reference (eval-mode dropout)."""
    (w0, b0), (w1, b1), (w2, b2), (w3, b3) = params
    h = jnp.maximum(x @ w0 + b0, 0.2 * (x @ w0 + b0))
    h = jnp.maximum(h @ w1 + b1, 0.2 * (h @ w1 + b1))
    h = jnp.maximum(h @ w2 + b2, 0.2 * (h @ w2 + b2))
    h = jnp.tanh(h @ w3 + b3)
    return h.reshape(x.shape[0], 28, 28)


if __name__ == "__main__":
    key = jax.random.PRNGKey(0)
    k_x, k_p = jax.random.split(key)

    B = 8
    x = jax.random.normal(k_x, (B, D_IN), dtype=jnp.float32)   # latent noise
    params = init_params(k_p)
    prepped = prepare_params(params)                           # one-time bf16/pad

    y = generator_forward(x, prepped)
    y = jax.block_until_ready(y)

    assert y.shape == (B, 28, 28), y.shape
    assert y.dtype == jnp.bfloat16, y.dtype

    yf = y.astype(jnp.float32)
    assert bool(jnp.all(jnp.isfinite(yf)))
    assert bool(jnp.all(jnp.abs(yf) <= 1.0))   # tanh range

    # numerical parity vs f32 reference (bf16 matmuls + bf16 tanh/output)
    y_ref = generator_reference(x, params)
    err = float(jnp.max(jnp.abs(yf - y_ref)))
    assert err < 5e-2, err

    print("KERNEL_OK")
</pallas_src>

<mosaic_0001>
module attributes {stable_mosaic.version = 11 : i64} {
  func.func @generator_kernel(%arg0: i32, %arg1: memref<8x100xf32, #tpu.memory_space<vmem>>, %arg2: memref<128x128xbf16, #tpu.memory_space<vmem>>, %arg3: memref<1x128xf32, #tpu.memory_space<vmem>>, %arg4: memref<128x128xbf16, #tpu.memory_space<vmem>>, %arg5: memref<1x128xf32, #tpu.memory_space<vmem>>, %arg6: memref<128x128xbf16, #tpu.memory_space<vmem>>, %arg7: memref<1x128xf32, #tpu.memory_space<vmem>>, %arg8: memref<128x896xbf16, #tpu.memory_space<vmem>>, %arg9: memref<1x896xf32, #tpu.memory_space<vmem>>, %arg10: memref<8x784xbf16, #tpu.memory_space<vmem>>, %arg11: memref<8x128xbf16, #tpu.memory_space<vmem>>) attributes {dimension_semantics = [#tpu.dimension_semantics<parallel>], iteration_bounds = array<i64: 1>, scalar_prefetch = 0 : i64, scratch_operands = 1 : i64, tpu.core_type = #tpu.core_type<tc>, window_params = [{transform_indices = @transform_0, window_bounds = array<i64: 8, 100>}, {pipeline_mode = #tpu.pipeline_mode<synchronous>, transform_indices = @transform_1, window_bounds = array<i64: 128, 128>}, {pipeline_mode = #tpu.pipeline_mode<synchronous>, transform_indices = @transform_2, window_bounds = array<i64: 1, 128>}, {pipeline_mode = #tpu.pipeline_mode<synchronous>, transform_indices = @transform_3, window_bounds = array<i64: 128, 128>}, {pipeline_mode = #tpu.pipeline_mode<synchronous>, transform_indices = @transform_4, window_bounds = array<i64: 1, 128>}, {pipeline_mode = #tpu.pipeline_mode<synchronous>, transform_indices = @transform_5, window_bounds = array<i64: 128, 128>}, {pipeline_mode = #tpu.pipeline_mode<synchronous>, transform_indices = @transform_6, window_bounds = array<i64: 1, 128>}, {pipeline_mode = #tpu.pipeline_mode<synchronous>, transform_indices = @transform_7, window_bounds = array<i64: 128, 896>}, {pipeline_mode = #tpu.pipeline_mode<synchronous>, transform_indices = @transform_8, window_bounds = array<i64: 1, 896>}, {transform_indices = @transform_9, window_bounds = array<i64: 8, 784>}]} {
    %cst = arith.constant 0.000000e+00 : bf16
    %0 = vector.broadcast %cst : bf16 to vector<8x128xbf16>
    %c0 = arith.constant 0 : index
    %c0_0 = arith.constant 0 : index
    %1 = vector.load %arg11[%c0, %c0_0] : memref<8x128xbf16, #tpu.memory_space<vmem>>, vector<8x128xbf16>
    tpu.vector_store %arg11[%c0, %c0_0], %0 {strides = array<i32>} : memref<8x128xbf16, #tpu.memory_space<vmem>>, vector<8x128xbf16>,
    %c0_1 = arith.constant 0 : index
    %c0_2 = arith.constant 0 : index
    %2 = vector.load %arg1[%c0_1, %c0_2] : memref<8x100xf32, #tpu.memory_space<vmem>>, vector<8x100xf32>
    %3 = arith.truncf %2 : vector<8x100xf32> to vector<8x100xbf16>
    %c0_3 = arith.constant 0 : index
    %c0_4 = arith.constant 0 : index
    %4 = vector.load %arg11[%c0_3, %c0_4] : memref<8x128xbf16, #tpu.memory_space<vmem>>, vector<8x100xbf16>
    tpu.vector_store %arg11[%c0_3, %c0_4], %3 {strides = array<i32>} : memref<8x128xbf16, #tpu.memory_space<vmem>>, vector<8x100xbf16>,
    %c0_5 = arith.constant 0 : index
    %c0_6 = arith.constant 0 : index
    %5 = vector.load %arg11[%c0_5, %c0_6] : memref<8x128xbf16, #tpu.memory_space<vmem>>, vector<8x128xbf16>
    %c0_7 = arith.constant 0 : index
    %c0_8 = arith.constant 0 : index
    %6 = vector.load %arg2[%c0_7, %c0_8] : memref<128x128xbf16, #tpu.memory_space<vmem>>, vector<128x128xbf16>
    %cst_9 = arith.constant dense<0.000000e+00> : vector<8x128xf32>
    %7 = tpu.matmul %5, %6, %cst_9 {dimension_numbers = #tpu.dot_dimension_numbers<[1], [0], [0], [1], [0, 0, 1, 1], [], []>} : vector<8x128xbf16>, vector<128x128xbf16>, vector<8x128xf32> -> vector<8x128xf32>
    %c0_10 = arith.constant 0 : index
    %c0_11 = arith.constant 0 : index
    %8 = vector.load %arg3[%c0_10, %c0_11] : memref<1x128xf32, #tpu.memory_space<vmem>>, vector<1x128xf32>
    %9 = vector.broadcast %8 : vector<1x128xf32> to vector<8x128xf32>
    %10 = arith.addf %7, %9 : vector<8x128xf32>
    %cst_12 = arith.constant 2.000000e-01 : f32
    %11 = vector.broadcast %cst_12 : f32 to vector<8x128xf32>
    %12 = arith.mulf %11, %10 : vector<8x128xf32>
    %13 = arith.maximumf %10, %12 : vector<8x128xf32>
    %14 = arith.truncf %13 : vector<8x128xf32> to vector<8x128xbf16>
    %c0_13 = arith.constant 0 : index
    %c0_14 = arith.constant 0 : index
    %15 = vector.load %arg4[%c0_13, %c0_14] : memref<128x128xbf16, #tpu.memory_space<vmem>>, vector<128x128xbf16>
    %cst_15 = arith.constant dense<0.000000e+00> : vector<8x128xf32>
    %16 = tpu.matmul %14, %15, %cst_15 {dimension_numbers = #tpu.dot_dimension_numbers<[1], [0], [0], [1], [0, 0, 1, 1], [], []>} : vector<8x128xbf16>, vector<128x128xbf16>, vector<8x128xf32> -> vector<8x128xf32>
    %c0_16 = arith.constant 0 : index
    %c0_17 = arith.constant 0 : index
    %17 = vector.load %arg5[%c0_16, %c0_17] : memref<1x128xf32, #tpu.memory_space<vmem>>, vector<1x128xf32>
    %18 = vector.broadcast %17 : vector<1x128xf32> to vector<8x128xf32>
    %19 = arith.addf %16, %18 : vector<8x128xf32>
    %cst_18 = arith.constant 2.000000e-01 : f32
    %20 = vector.broadcast %cst_18 : f32 to vector<8x128xf32>
    %21 = arith.mulf %20, %19 : vector<8x128xf32>
    %22 = arith.maximumf %19, %21 : vector<8x128xf32>
    %23 = arith.truncf %22 : vector<8x128xf32> to vector<8x128xbf16>
    %c0_19 = arith.constant 0 : index
    %c0_20 = arith.constant 0 : index
    %24 = vector.load %arg6[%c0_19, %c0_20] : memref<128x128xbf16, #tpu.memory_space<vmem>>, vector<128x128xbf16>
    %cst_21 = arith.constant dense<0.000000e+00> : vector<8x128xf32>
    %25 = tpu.matmul %23, %24, %cst_21 {dimension_numbers = #tpu.dot_dimension_numbers<[1], [0], [0], [1], [0, 0, 1, 1], [], []>} : vector<8x128xbf16>, vector<128x128xbf16>, vector<8x128xf32> -> vector<8x128xf32>
    %c0_22 = arith.constant 0 : index
    %c0_23 = arith.constant 0 : index
    %26 = vector.load %arg7[%c0_22, %c0_23] : memref<1x128xf32, #tpu.memory_space<vmem>>, vector<1x128xf32>
    %27 = vector.broadcast %26 : vector<1x128xf32> to vector<8x128xf32>
    %28 = arith.addf %25, %27 : vector<8x128xf32>
    %cst_24 = arith.constant 2.000000e-01 : f32
    %29 = vector.broadcast %cst_24 : f32 to vector<8x128xf32>
    %30 = arith.mulf %29, %28 : vector<8x128xf32>
    %31 = arith.maximumf %28, %30 : vector<8x128xf32>
    %32 = arith.truncf %31 : vector<8x128xf32> to vector<8x128xbf16>
    %c0_25 = arith.constant 0 : index
    %c0_26 = arith.constant 0 : index
    %33 = vector.load %arg8[%c0_25, %c0_26] : memref<128x896xbf16, #tpu.memory_space<vmem>>, vector<128x896xbf16>
    %cst_27 = arith.constant dense<0.000000e+00> : vector<8x896xf32>
    %34 = tpu.matmul %32, %33, %cst_27 {dimension_numbers = #tpu.dot_dimension_numbers<[1], [0], [0], [1], [0, 0, 1, 1], [], []>} : vector<8x128xbf16>, vector<128x896xbf16>, vector<8x896xf32> -> vector<8x896xf32>
    %c0_28 = arith.constant 0 : index
    %c0_29 = arith.constant 0 : index
    %35 = vector.load %arg9[%c0_28, %c0_29] : memref<1x896xf32, #tpu.memory_space<vmem>>, vector<1x896xf32>
    %36 = vector.broadcast %35 : vector<1x896xf32> to vector<8x896xf32>
    %37 = arith.addf %34, %36 : vector<8x896xf32>
    %38 = arith.truncf %37 : vector<8x896xf32> to vector<8x896xbf16>
    %39 = math.tanh %38 : vector<8x896xbf16>
    %40 = vector.extract_strided_slice %39 {offsets = [0, 0], sizes = [8, 784], strides = [1, 1]} : vector<8x896xbf16> to vector<8x784xbf16>
    %c0_30 = arith.constant 0 : index
    %c0_31 = arith.constant 0 : index
    %41 = vector.load %arg10[%c0_30, %c0_31] : memref<8x784xbf16, #tpu.memory_space<vmem>>, vector<8x784xbf16>
    tpu.vector_store %arg10[%c0_30, %c0_31], %40 {strides = array<i32>} : memref<8x784xbf16, #tpu.memory_space<vmem>>, vector<8x784xbf16>,
    return
  }
  func.func @transform_0(%arg0: i32) -> (i32, i32) {
    %c0_i32 = arith.constant 0 : i32
    %c0_i32_0 = arith.constant 0 : i32
    return %arg0, %c0_i32 : i32, i32
  }
  func.func @transform_1(%arg0: i32) -> (i32, i32) {
    %c0_i32 = arith.constant 0 : i32
    %c0_i32_0 = arith.constant 0 : i32
    %c0_i32_1 = arith.constant 0 : i32
    return %c0_i32, %c0_i32_0 : i32, i32
  }
  func.func @transform_2(%arg0: i32) -> (i32, i32) {
    %c0_i32 = arith.constant 0 : i32
    %c0_i32_0 = arith.constant 0 : i32
    %c0_i32_1 = arith.constant 0 : i32
    return %c0_i32, %c0_i32_0 : i32, i32
  }
  func.func @transform_3(%arg0: i32) -> (i32, i32) {
    %c0_i32 = arith.constant 0 : i32
    %c0_i32_0 = arith.constant 0 : i32
    %c0_i32_1 = arith.constant 0 : i32
    return %c0_i32, %c0_i32_0 : i32, i32
  }
  func.func @transform_4(%arg0: i32) -> (i32, i32) {
    %c0_i32 = arith.constant 0 : i32
    %c0_i32_0 = arith.constant 0 : i32
    %c0_i32_1 = arith.constant 0 : i32
    return %c0_i32, %c0_i32_0 : i32, i32
  }
  func.func @transform_5(%arg0: i32) -> (i32, i32) {
    %c0_i32 = arith.constant 0 : i32
    %c0_i32_0 = arith.constant 0 : i32
    %c0_i32_1 = arith.constant 0 : i32
    return %c0_i32, %c0_i32_0 : i32, i32
  }
  func.func @transform_6(%arg0: i32) -> (i32, i32) {
    %c0_i32 = arith.constant 0 : i32
    %c0_i32_0 = arith.constant 0 : i32
    %c0_i32_1 = arith.constant 0 : i32
    return %c0_i32, %c0_i32_0 : i32, i32
  }
  func.func @transform_7(%arg0: i32) -> (i32, i32) {
    %c0_i32 = arith.constant 0 : i32
    %c0_i32_0 = arith.constant 0 : i32
    %c0_i32_1 = arith.constant 0 : i32
    return %c0_i32, %c0_i32_0 : i32, i32
  }
  func.func @transform_8(%arg0: i32) -> (i32, i32) {
    %c0_i32 = arith.constant 0 : i32
    %c0_i32_0 = arith.constant 0 : i32
    %c0_i32_1 = arith.constant 0 : i32
    return %c0_i32, %c0_i32_0 : i32, i32
  }
  func.func @transform_9(%arg0: i32) -> (i32, i32) {
    %c0_i32 = arith.constant 0 : i32
    %c0_i32_0 = arith.constant 0 : i32
    return %arg0, %c0_i32 : i32, i32
  }
}

</mosaic_0001>

<llo_original>
// kernel: tpu_custom_call.1
$region0: #{tpu_custom_call.1}
  #allocation0 [shape = 'u32[]', space=smem, size = 0x4, offset = 0x4, fixed_abs, tag = 'smem constant byte address 0x4 - core index']
  #allocation1 [shape = 'u32[144,128]{1,0:T(1,128)}', space=vmem, size = 0x12000, scoped, tag = 'internal scratch']
  #allocation2 [shape = 'bf16[8,128]{1,0:T(8,128)(2,1)}', space=vmem, size = 0x800, scoped, tag = 'scratch operand']
  %s0 = inlined_call_operand.hbm [shape: f32[8,100], index: 0, kind: input, shape index: {}]
  %s1 = inlined_call_operand.hbm [shape: bf16[128,128], index: 1, kind: input, shape index: {}]
  %s2 = inlined_call_operand.vmem [shape: f32[1,128], index: 2, kind: input, shape index: {}]
  %s3 = inlined_call_operand.hbm [shape: bf16[128,128], index: 3, kind: input, shape index: {}]
  %s4 = inlined_call_operand.vmem [shape: f32[1,128], index: 4, kind: input, shape index: {}]
  %s5 = inlined_call_operand.hbm [shape: bf16[128,128], index: 5, kind: input, shape index: {}]
  %s6 = inlined_call_operand.vmem [shape: f32[1,128], index: 6, kind: input, shape index: {}]
  %s7 = inlined_call_operand.hbm [shape: bf16[128,896], index: 7, kind: input, shape index: {}]
  %s8 = inlined_call_operand.vmem [shape: f32[1,896], index: 8, kind: input, shape index: {}]
  %s9 = inlined_call_operand.hbm [shape: bf16[8,784], index: 9, kind: output, shape index: {}]
  %s10 = sld [smem:[#allocation0]]
  $region66: #{tpu_custom_call.1} parent=0
    _
  %s12 = ssub.s32 1, %s10
  %s13 = scalar_select 0, %s12, %s10
  $region1: #{tpu_custom_call.1} parent=0
    #allocation3 [shape = 'u8[4096]{0}', space=vmem, size = 0x1000, scoped, tag = 'input window, operand 0, single buffered']
    #allocation4 [shape = 's32[1]{0}', space=sflag, size = 0x4, scoped, tag = 'scoped memory for tpu_custom_call.1']
    #allocation5 [shape = 's32[1]{0}', space=sflag, size = 0x4, scoped, tag = 'scoped memory for tpu_custom_call.1']
    #allocation6 [shape = 'u8[32768]{0}', space=vmem, size = 0x8000, scoped, tag = 'input window, operand 1, single buffered']
    #allocation7 [shape = 's32[1]{0}', space=sflag, size = 0x4, scoped, tag = 'scoped memory for tpu_custom_call.1']
    #allocation8 [shape = 'u8[32768]{0}', space=vmem, size = 0x8000, scoped, tag = 'input window, operand 3, single buffered']
    #allocation9 [shape = 'u8[32768]{0}', space=vmem, size = 0x8000, scoped, tag = 'input window, operand 5, single buffered']
    #allocation10 [shape = 's32[1]{0}', space=sflag, size = 0x4, scoped, tag = 'scoped memory for tpu_custom_call.1']
    #allocation11 [shape = 'u8[229376]{0}', space=vmem, size = 0x38000, scoped, tag = 'input window, operand 7, single buffered']
    #allocation12 [shape = 'u8[14336]{0}', space=vmem, size = 0x3800, scoped, tag = 'output window, operand 0, single buffered']
    %14 = vsyncpa [#allocation4], 0
    %15 = vsyncpa [#allocation7], 0
    %16 = vsyncpa [#allocation10], 0
    %17 = vsyncpa [#allocation5], 0
    // Predicated region
    $region2: #{tpu_custom_call.1} parent=1 // pred_check
      _
    $region3: #{tpu_custom_call.1} parent=1 // pred_check_branch
      %19 = sbr.rel (0) target = $region5
    $region4: #{tpu_custom_call.1} parent=1 // pred_region
      %s21 = ssub.s32 128, 128
      %22 = vsyncadd [#allocation4], %s21
      %s24 = sshll.u32 [#allocation3], 4
      %s25 = int_to_ptr.vmem [resolvable:$true] %s24
      %27 = dma.hbm_to_vmem [thread:$0]  %s0, 128, %s25, [#allocation4]
    $region5: #{tpu_custom_call.1} parent=1 // pred_fallthru
      _
    // Predicated region
    $region6: #{tpu_custom_call.1} parent=1 // pred_check
      _
    $region7: #{tpu_custom_call.1} parent=1 // pred_check_branch
      %29 = sbr.rel (0) target = $region9
    $region8: #{tpu_custom_call.1} parent=1 // pred_region
      %s31 = ssub.s32 1024, 1024
      %32 = vsyncadd [#allocation7], %s31
      %s33 = sshll.u32 [#allocation6], 4
      %s34 = int_to_ptr.vmem [resolvable:$true] %s33
      %39 = dma.hbm_to_vmem [thread:$0]  %s1, 1024, %s34, [#allocation7], 64, 64, 4
    $region9: #{tpu_custom_call.1} parent=1 // pred_fallthru
      _
    // Predicated region
    $region10: #{tpu_custom_call.1} parent=1 // pred_check
      _
    $region11: #{tpu_custom_call.1} parent=1 // pred_check_branch
      %41 = sbr.rel (0) target = $region13
    $region12: #{tpu_custom_call.1} parent=1 // pred_region
      _
    $region13: #{tpu_custom_call.1} parent=1 // pred_fallthru
      _
    // Predicated region
    $region14: #{tpu_custom_call.1} parent=1 // pred_check
      _
    $region15: #{tpu_custom_call.1} parent=1 // pred_check_branch
      %43 = sbr.rel (0) target = $region17
    $region16: #{tpu_custom_call.1} parent=1 // pred_region
      %s45 = ssub.s32 1024, 1024
      %46 = vsyncadd [#allocation7], %s45
      %s47 = sshll.u32 [#allocation8], 4
      %s48 = int_to_ptr.vmem [resolvable:$true] %s47
      %53 = dma.hbm_to_vmem [thread:$0]  %s3, 1024, %s48, [#allocation7], 64, 64, 4
    $region17: #{tpu_custom_call.1} parent=1 // pred_fallthru
      _
    // Predicated region
    $region18: #{tpu_custom_call.1} parent=1 // pred_check
      _
    $region19: #{tpu_custom_call.1} parent=1 // pred_check_branch
      %55 = sbr.rel (0) target = $region21
    $region20: #{tpu_custom_call.1} parent=1 // pred_region
      _
    $region21: #{tpu_custom_call.1} parent=1 // pred_fallthru
      _
    // Predicated region
    $region22: #{tpu_custom_call.1} parent=1 // pred_check
      _
    $region23: #{tpu_custom_call.1} parent=1 // pred_check_branch
      %57 = sbr.rel (0) target = $region25
    $region24: #{tpu_custom_call.1} parent=1 // pred_region
      %s59 = ssub.s32 1024, 1024
      %60 = vsyncadd [#allocation10], %s59
      %s61 = sshll.u32 [#allocation9], 4
      %s62 = int_to_ptr.vmem [resolvable:$true] %s61
      %67 = dma.hbm_to_vmem [thread:$0]  %s5, 1024, %s62, [#allocation10], 64, 64, 4
    $region25: #{tpu_custom_call.1} parent=1 // pred_fallthru
      _
    // Predicated region
    $region26: #{tpu_custom_call.1} parent=1 // pred_check
      _
    $region27: #{tpu_custom_call.1} parent=1 // pred_check_branch
      %69 = sbr.rel (0) target = $region29
    $region28: #{tpu_custom_call.1} parent=1 // pred_region
      _
    $region29: #{tpu_custom_call.1} parent=1 // pred_fallthru
      _
    // Predicated region
    $region30: #{tpu_custom_call.1} parent=1 // pred_check
      _
    $region31: #{tpu_custom_call.1} parent=1 // pred_check_branch
      %71 = sbr.rel (0) target = $region33
    $region32: #{tpu_custom_call.1} parent=1 // pred_region
      %s73 = ssub.s32 7168, 7168
      %74 = vsyncadd [#allocation10], %s73
      %s75 = sshll.u32 [#allocation11], 4
      %s76 = int_to_ptr.vmem [resolvable:$true] %s75
      %81 = dma.hbm_to_vmem [thread:$0]  %s7, 7168, %s76, [#allocation10], 448, 448, 28
    $region33: #{tpu_custom_call.1} parent=1 // pred_fallthru
      _
    // Predicated region
    $region34: #{tpu_custom_call.1} parent=1 // pred_check
      _
    $region35: #{tpu_custom_call.1} parent=1 // pred_check_branch
      %83 = sbr.rel (0) target = $region37
    $region36: #{tpu_custom_call.1} parent=1 // pred_region
      _
    $region37: #{tpu_custom_call.1} parent=1 // pred_fallthru
      _
    // Predicated region
    $region38: #{tpu_custom_call.1} parent=1 // pred_check
      _
    $region39: #{tpu_custom_call.1} parent=1 // pred_check_branch
      %85 = sbr.rel (0) target = $region41
    $region40: #{tpu_custom_call.1} parent=1 // pred_region
      %86 = dma.done [#allocation4], 128
    $region41: #{tpu_custom_call.1} parent=1 // pred_fallthru
      _
    // Predicated region
    $region42: #{tpu_custom_call.1} parent=1 // pred_check
      _
    $region43: #{tpu_custom_call.1} parent=1 // pred_check_branch
      %88 = sbr.rel (0) target = $region45
    $region44: #{tpu_custom_call.1} parent=1 // pred_region
      %89 = dma.done [#allocation7], 1024
    $region45: #{tpu_custom_call.1} parent=1 // pred_fallthru
      _
    // Predicated region
    $region46: #{tpu_custom_call.1} parent=1 // pred_check
      _
    $region47: #{tpu_custom_call.1} parent=1 // pred_check_branch
      %91 = sbr.rel (0) target = $region49
    $region48: #{tpu_custom_call.1} parent=1 // pred_region
      %92 = dma.done [#allocation7], 1024
    $region49: #{tpu_custom_call.1} parent=1 // pred_fallthru
      _
    // Predicated region
    $region50: #{tpu_custom_call.1} parent=1 // pred_check
      _
    $region51: #{tpu_custom_call.1} parent=1 // pred_check_branch
      %94 = sbr.rel (0) target = $region53
    $region52: #{tpu_custom_call.1} parent=1 // pred_region
      %95 = dma.done [#allocation10], 1024
    $region53: #{tpu_custom_call.1} parent=1 // pred_fallthru
      _
    // Predicated region
    $region54: #{tpu_custom_call.1} parent=1 // pred_check
      _
    $region55: #{tpu_custom_call.1} parent=1 // pred_check_branch
      %97 = sbr.rel (0) target = $region57
    $region56: #{tpu_custom_call.1} parent=1 // pred_region
      %98 = dma.done [#allocation10], 7168
    $region57: #{tpu_custom_call.1} parent=1 // pred_fallthru
      _
    %100 = vst [vmem:[#allocation2] sm:$0xf] 0
    %v101 = vld [vmem:[#allocation3] sm:$0xff]
    %v102 = vpack.c.bf16 %v101, %v101
    %vm103 = vcmask 814080
    %104 = vst.msk [vmem:[#allocation2] sm:$0xf] %vm103, %v102
    %v105 = vld [vmem:[#allocation2] sm:$0xf]
    %v106 = vld [vmem:[#allocation6] sm:$0xf]
    %v107 = vld [vmem:[#allocation6 + $0x4] sm:$0xf]
    %v108 = vld [vmem:[#allocation6 + $0x8] sm:$0xf]
    %v109 = vld [vmem:[#allocation6 + $0xc] sm:$0xf]
    %v110 = vld [vmem:[#allocation6 + $0x10] sm:$0xf]
    %v111 = vld [vmem:[#allocation6 + $0x14] sm:$0xf]
    %v112 = vld [vmem:[#allocation6 + $0x18] sm:$0xf]
    %v113 = vld [vmem:[#allocation6 + $0x1c] sm:$0xf]
    %v114 = vld [vmem:[#allocation6 + $0x20] sm:$0xf]
    %v115 = vld [vmem:[#allocation6 + $0x24] sm:$0xf]
    %v116 = vld [vmem:[#allocation6 + $0x28] sm:$0xf]
    %v117 = vld [vmem:[#allocation6 + $0x2c] sm:$0xf]
    %v118 = vld [vmem:[#allocation6 + $0x30] sm:$0xf]
    %v119 = vld [vmem:[#allocation6 + $0x34] sm:$0xf]
    %v120 = vld [vmem:[#allocation6 + $0x38] sm:$0xf]
    %v121 = vld [vmem:[#allocation6 + $0x3c] sm:$0xf]
    %v122 = vld [vmem:[%s2] sm:$0x1]
    %v124 = vlaneseq
    %v125 = vshrl.u32 %v124, 7
    %v126 = vsub.s32 0, %v125
    %v127 = vrot.slane %v122, %v126
    %v145 = vunpack.c.l.b16 %v106
    %v146 = vunpack.c.l.b16 %v107
    %v147 = vunpack.c.l.b16 %v108
    %v148 = vunpack.c.l.b16 %v109
    %v149 = vunpack.c.l.b16 %v110
    %v150 = vunpack.c.l.b16 %v111
    %v151 = vunpack.c.l.b16 %v112
    %v152 = vunpack.c.l.b16 %v113
    %v153 = vunpack.c.l.b16 %v114
    %v154 = vunpack.c.l.b16 %v115
    %v155 = vunpack.c.l.b16 %v116
    %v156 = vunpack.c.l.b16 %v117
    %v157 = vunpack.c.l.b16 %v118
    %v158 = vunpack.c.l.b16 %v119
    %v159 = vunpack.c.l.b16 %v120
    %v160 = vunpack.c.l.b16 %v121
    %v161 = vpack.c.b16 %v146, %v145
    %v162 = vpack.c.b16 %v148, %v147
    %v163 = vpack.c.b16 %v150, %v149
    %v164 = vpack.c.b16 %v152, %v151
    %v165 = vpack.c.b16 %v154, %v153
    %v166 = vpack.c.b16 %v156, %v155
    %v167 = vpack.c.b16 %v158, %v157
    %v168 = vpack.c.b16 %v160, %v159
    %177 = vmatprep.subr.bf16.mxu0 0
    %178 = vmatpush1.bf16.msra.mxu0 %v168
    %179 = vmatprep.subr.bf16.mxu0 0
    %180 = vmatpush1.bf16.msra.mxu0 %v167
    %181 = vmatprep.subr.bf16.mxu0 0
    %182 = vmatpush1.bf16.msra.mxu0 %v166
    %183 = vmatprep.subr.bf16.mxu0 0
    %184 = vmatpush1.bf16.msra.mxu0 %v165
    %185 = vmatprep.subr.bf16.mxu0 0
    %186 = vmatpush1.bf16.msra.mxu0 %v164
    %187 = vmatprep.subr.bf16.mxu0 0
    %188 = vmatpush1.bf16.msra.mxu0 %v163
    %189 = vmatprep.subr.bf16.mxu0 0
    %190 = vmatpush1.bf16.msra.mxu0 %v162
    %191 = vmatprep.subr.bf16.mxu0 0
    %192 = vmatpush1.bf16.msra.mxu0 %v161
    %193 = vmatprep.subr.bf16.mxu0 0
    %194 = vmatpush2.bf16.msra.mxu0 0
    %195 = vmatprep.subr.bf16.mxu0 0
    %196 = vmatpush2.bf16.msra.mxu0 0
    %197 = vmatprep.subr.bf16.mxu0 0
    %198 = vmatpush2.bf16.msra.mxu0 0
    %199 = vmatprep.subr.bf16.mxu0 0
    %200 = vmatpush2.bf16.msra.mxu0 0
    %201 = vmatprep.subr.bf16.mxu0 0
    %202 = vmatpush2.bf16.msra.mxu0 0
    %203 = vmatprep.subr.bf16.mxu0 0
    %204 = vmatpush2.bf16.msra.mxu0 0
    %205 = vmatprep.subr.bf16.mxu0 0
    %206 = vmatpush2.bf16.msra.mxu0 0
    %207 = vmatprep.subr.bf16.mxu0 0
    %208 = vmatpush2.bf16.msra.mxu0 0
    %209 = vmatprep.mubr.bf16.mxu0 0
    %210 = vmatmul.mubr.bf16.gmra.mxu0 %v105
    %v211 = vpop.f32.mrf.mxu0
    %v212 = vadd.f32 %v127, %v211
    %v213 = vpop.f32.mrf.mxu0
    %v214 = vpop.f32.mrf.mxu0
    %v215 = vpop.f32.mrf.mxu0
    %216 = vdwg.mxu0
    %v217 = vmul.f32 %v212, 0.2
    %v218 = vmax.f32 %v212, %v217
    %v219 = vpack.c.bf16 %v218, %v218
    %v220 = vld [vmem:[#allocation8] sm:$0xf]
    %v221 = vld [vmem:[#allocation8 + $0x4] sm:$0xf]
    %v222 = vld [vmem:[#allocation8 + $0x8] sm:$0xf]
    %v223 = vld [vmem:[#allocation8 + $0xc] sm:$0xf]
    %v224 = vld [vmem:[#allocation8 + $0x10] sm:$0xf]
    %v225 = vld [vmem:[#allocation8 + $0x14] sm:$0xf]
    %v226 = vld [vmem:[#allocation8 + $0x18] sm:$0xf]
    %v227 = vld [vmem:[#allocation8 + $0x1c] sm:$0xf]
    %v228 = vld [vmem:[#allocation8 + $0x20] sm:$0xf]
    %v229 = vld [vmem:[#allocation8 + $0x24] sm:$0xf]
    %v230 = vld [vmem:[#allocation8 + $0x28] sm:$0xf]
    %v231 = vld [vmem:[#allocation8 + $0x2c] sm:$0xf]
    %v232 = vld [vmem:[#allocation8 + $0x30] sm:$0xf]
    %v233 = vld [vmem:[#allocation8 + $0x34] sm:$0xf]
    %v234 = vld [vmem:[#allocation8 + $0x38] sm:$0xf]
    %v235 = vld [vmem:[#allocation8 + $0x3c] sm:$0xf]
    %v236 = vld [vmem:[%s4] sm:$0x1]
    %v238 = vlaneseq
    %v239 = vshrl.u32 %v238, 7
    %v240 = vsub.s32 0, %v239
    %v241 = vrot.slane %v236, %v240
    %v259 = vunpack.c.l.b16 %v220
    %v260 = vunpack.c.l.b16 %v221
    %v261 = vunpack.c.l.b16 %v222
    %v262 = vunpack.c.l.b16 %v223
    %v263 = vunpack.c.l.b16 %v224
    %v264 = vunpack.c.l.b16 %v225
    %v265 = vunpack.c.l.b16 %v226
    %v266 = vunpack.c.l.b16 %v227
    %v267 = vunpack.c.l.b16 %v228
    %v268 = vunpack.c.l.b16 %v229
    %v269 = vunpack.c.l.b16 %v230
    %v270 = vunpack.c.l.b16 %v231
    %v271 = vunpack.c.l.b16 %v232
    %v272 = vunpack.c.l.b16 %v233
    %v273 = vunpack.c.l.b16 %v234
    %v274 = vunpack.c.l.b16 %v235
    %v275 = vpack.c.b16 %v260, %v259
    %v276 = vpack.c.b16 %v262, %v261
    %v277 = vpack.c.b16 %v264, %v263
    %v278 = vpack.c.b16 %v266, %v265
    %v279 = vpack.c.b16 %v268, %v267
    %v280 = vpack.c.b16 %v270, %v269
    %v281 = vpack.c.b16 %v272, %v271
    %v282 = vpack.c.b16 %v274, %v273
    %291 = vmatprep.subr.bf16.mxu0 0
    %292 = vmatpush1.bf16.msra.mxu0 %v282
    %293 = vmatprep.subr.bf16.mxu0 0
    %294 = vmatpush1.bf16.msra.mxu0 %v281
    %295 = vmatprep.subr.bf16.mxu0 0
    %296 = vmatpush1.bf16.msra.mxu0 %v280
    %297 = vmatprep.subr.bf16.mxu0 0
    %298 = vmatpush1.bf16.msra.mxu0 %v279
    %299 = vmatprep.subr.bf16.mxu0 0
    %300 = vmatpush1.bf16.msra.mxu0 %v278
    %301 = vmatprep.subr.bf16.mxu0 0
    %302 = vmatpush1.bf16.msra.mxu0 %v277
    %303 = vmatprep.subr.bf16.mxu0 0
    %304 = vmatpush1.bf16.msra.mxu0 %v276
    %305 = vmatprep.subr.bf16.mxu0 0
    %306 = vmatpush1.bf16.msra.mxu0 %v275
    %307 = vmatprep.subr.bf16.mxu0 0
    %308 = vmatpush2.bf16.msra.mxu0 0
    %309 = vmatprep.subr.bf16.mxu0 0
    %310 = vmatpush2.bf16.msra.mxu0 0
    %311 = vmatprep.subr.bf16.mxu0 0
    %312 = vmatpush2.bf16.msra.mxu0 0
    %313 = vmatprep.subr.bf16.mxu0 0
    %314 = vmatpush2.bf16.msra.mxu0 0
    %315 = vmatprep.subr.bf16.mxu0 0
    %316 = vmatpush2.bf16.msra.mxu0 0
    %317 = vmatprep.subr.bf16.mxu0 0
    %318 = vmatpush2.bf16.msra.mxu0 0
    %319 = vmatprep.subr.bf16.mxu0 0
    %320 = vmatpush2.bf16.msra.mxu0 0
    %321 = vmatprep.subr.bf16.mxu0 0
    %322 = vmatpush2.bf16.msra.mxu0 0
    %323 = vmatprep.mubr.bf16.mxu0 0
    %324 = vmatmul.mubr.bf16.gmra.mxu0 %v219
    %v325 = vpop.f32.mrf.mxu0
    %v326 = vadd.f32 %v241, %v325
    %v327 = vpop.f32.mrf.mxu0
    %v328 = vpop.f32.mrf.mxu0
    %v329 = vpop.f32.mrf.mxu0
    %330 = vdwg.mxu0
    %v331 = vmul.f32 %v326, 0.2
    %v332 = vmax.f32 %v326, %v331
    %v333 = vpack.c.bf16 %v332, %v332
    %v334 = vld [vmem:[#allocation9] sm:$0xf]
    %v335 = vld [vmem:[#allocation9 + $0x4] sm:$0xf]
    %v336 = vld [vmem:[#allocation9 + $0x8] sm:$0xf]
    %v337 = vld [vmem:[#allocation9 + $0xc] sm:$0xf]
    %v338 = vld [vmem:[#allocation9 + $0x10] sm:$0xf]
    %v339 = vld [vmem:[#allocation9 + $0x14] sm:$0xf]
    %v340 = vld [vmem:[#allocation9 + $0x18] sm:$0xf]
    %v341 = vld [vmem:[#allocation9 + $0x1c] sm:$0xf]
    %v342 = vld [vmem:[#allocation9 + $0x20] sm:$0xf]
    %v343 = vld [vmem:[#allocation9 + $0x24] sm:$0xf]
    %v344 = vld [vmem:[#allocation9 + $0x28] sm:$0xf]
    %v345 = vld [vmem:[#allocation9 + $0x2c] sm:$0xf]
    %v346 = vld [vmem:[#allocation9 + $0x30] sm:$0xf]
    %v347 = vld [vmem:[#allocation9 + $0x34] sm:$0xf]
    %v348 = vld [vmem:[#allocation9 + $0x38] sm:$0xf]
    %v349 = vld [vmem:[#allocation9 + $0x3c] sm:$0xf]
    %v350 = vld [vmem:[%s6] sm:$0x1]
    %v352 = vlaneseq
    %v353 = vshrl.u32 %v352, 7
    %v354 = vsub.s32 0, %v353
    %v355 = vrot.slane %v350, %v354
    %v373 = vunpack.c.l.b16 %v334
    %v374 = vunpack.c.l.b16 %v335
    %v375 = vunpack.c.l.b16 %v336
    %v376 = vunpack.c.l.b16 %v337
    %v377 = vunpack.c.l.b16 %v338
    %v378 = vunpack.c.l.b16 %v339
    %v379 = vunpack.c.l.b16 %v340
    %v380 = vunpack.c.l.b16 %v341
    %v381 = vunpack.c.l.b16 %v342
    %v382 = vunpack.c.l.b16 %v343
    %v383 = vunpack.c.l.b16 %v344
    %v384 = vunpack.c.l.b16 %v345
    %v385 = vunpack.c.l.b16 %v346
    %v386 = vunpack.c.l.b16 %v347
    %v387 = vunpack.c.l.b16 %v348
    %v388 = vunpack.c.l.b16 %v349
    %v389 = vpack.c.b16 %v374, %v373
    %v390 = vpack.c.b16 %v376, %v375
    %v391 = vpack.c.b16 %v378, %v377
    %v392 = vpack.c.b16 %v380, %v379
    %v393 = vpack.c.b16 %v382, %v381
    %v394 = vpack.c.b16 %v384, %v383
    %v395 = vpack.c.b16 %v386, %v385
    %v396 = vpack.c.b16 %v388, %v387
    %405 = vmatprep.subr.bf16.mxu0 0
    %406 = vmatpush1.bf16.msra.mxu0 %v396
    %407 = vmatprep.subr.bf16.mxu0 0
    %408 = vmatpush1.bf16.msra.mxu0 %v395
    %409 = vmatprep.subr.bf16.mxu0 0
    %410 = vmatpush1.bf16.msra.mxu0 %v394
    %411 = vmatprep.subr.bf16.mxu0 0
    %412 = vmatpush1.bf16.msra.mxu0 %v393
    %413 = vmatprep.subr.bf16.mxu0 0
    %414 = vmatpush1.bf16.msra.mxu0 %v392
    %415 = vmatprep.subr.bf16.mxu0 0
    %416 = vmatpush1.bf16.msra.mxu0 %v391
    %417 = vmatprep.subr.bf16.mxu0 0
    %418 = vmatpush1.bf16.msra.mxu0 %v390
    %419 = vmatprep.subr.bf16.mxu0 0
    %420 = vmatpush1.bf16.msra.mxu0 %v389
    %421 = vmatprep.subr.bf16.mxu0 0
    %422 = vmatpush2.bf16.msra.mxu0 0
    %423 = vmatprep.subr.bf16.mxu0 0
    %424 = vmatpush2.bf16.msra.mxu0 0
    %425 = vmatprep.subr.bf16.mxu0 0
    %426 = vmatpush2.bf16.msra.mxu0 0
    %427 = vmatprep.subr.bf16.mxu0 0
    %428 = vmatpush2.bf16.msra.mxu0 0
    %429 = vmatprep.subr.bf16.mxu0 0
    %430 = vmatpush2.bf16.msra.mxu0 0
    %431 = vmatprep.subr.bf16.mxu0 0
    %432 = vmatpush2.bf16.msra.mxu0 0
    %433 = vmatprep.subr.bf16.mxu0 0
    %434 = vmatpush2.bf16.msra.mxu0 0
    %435 = vmatprep.subr.bf16.mxu0 0
    %436 = vmatpush2.bf16.msra.mxu0 0
    %437 = vmatprep.mubr.bf16.mxu0 0
    %438 = vmatmul.mubr.bf16.gmra.mxu0 %v333
    %v439 = vpop.f32.mrf.mxu0
    %v440 = vadd.f32 %v355, %v439
    %v441 = vpop.f32.mrf.mxu0
    %v442 = vpop.f32.mrf.mxu0
    %v443 = vpop.f32.mrf.mxu0
    %444 = vdwg.mxu0
    %v445 = vmul.f32 %v440, 0.2
    %v446 = vmax.f32 %v440, %v445
    %v447 = vpack.c.bf16 %v446, %v446
    %v448 = vld [vmem:[#allocation11] sm:$0xff]
    %v449 = vld [vmem:[#allocation11 + $0x8] sm:$0xff]
    %v450 = vld [vmem:[#allocation11 + $0x10] sm:$0xff]
    %v451 = vld [vmem:[#allocation11 + $0x18] sm:$0xf]
    %v452 = vld [vmem:[#allocation11 + $0x1c] sm:$0xff]
    %v453 = vld [vmem:[#allocation11 + $0x24] sm:$0xff]
    %v454 = vld [vmem:[#allocation11 + $0x2c] sm:$0xff]
    %v455 = vld [vmem:[#allocation11 + $0x34] sm:$0xf]
    %v456 = vld [vmem:[#allocation11 + $0x38] sm:$0xff]
    %v457 = vld [vmem:[#allocation11 + $0x40] sm:$0xff]
    %v458 = vld [vmem:[#allocation11 + $0x48] sm:$0xff]
    %v459 = vld [vmem:[#allocation11 + $0x50] sm:$0xf]
    %v460 = vld [vmem:[#allocation11 + $0x54] sm:$0xff]
    %v461 = vld [vmem:[#allocation11 + $0x5c] sm:$0xff]
    %v462 = vld [vmem:[#allocation11 + $0x64] sm:$0xff]
    %v463 = vld [vmem:[#allocation11 + $0x6c] sm:$0xf]
    %v464 = vld [vmem:[#allocation11 + $0x70] sm:$0xff]
    %v465 = vld [vmem:[#allocation11 + $0x78] sm:$0xff]
    %v466 = vld [vmem:[#allocation11 + $0x80] sm:$0xff]
    %v467 = vld [vmem:[#allocation11 + $0x88] sm:$0xf]
    %v468 = vld [vmem:[#allocation11 + $0x8c] sm:$0xff]
    %v469 = vld [vmem:[#allocation11 + $0x94] sm:$0xff]
    %v470 = vld [vmem:[#allocation11 + $0x9c] sm:$0xff]
    %v471 = vld [vmem:[#allocation11 + $0xa4] sm:$0xf]
    %v472 = vld [vmem:[#allocation11 + $0xa8] sm:$0xff]
    %v473 = vld [vmem:[#allocation11 + $0xb0] sm:$0xff]
    %v474 = vld [vmem:[#allocation11 + $0xb8] sm:$0xff]
    %v475 = vld [vmem:[#allocation11 + $0xc0] sm:$0xf]
    %v476 = vld [vmem:[#allocation11 + $0xc4] sm:$0xff]
    %v477 = vld [vmem:[#allocation11 + $0xcc] sm:$0xff]
    %v478 = vld [vmem:[#allocation11 + $0xd4] sm:$0xff]
    %v479 = vld [vmem:[#allocation11 + $0xdc] sm:$0xf]
    %v480 = vld [vmem:[#allocation11 + $0xe0] sm:$0xff]
    %v481 = vld [vmem:[#allocation11 + $0xe8] sm:$0xff]
    %v482 = vld [vmem:[#allocation11 + $0xf0] sm:$0xff]
    %v483 = vld [vmem:[#allocation11 + $0xf8] sm:$0xf]
    %v484 = vld [vmem:[#allocation11 + $0xfc] sm:$0xff]
    %v485 = vld [vmem:[#allocation11 + $0x104] sm:$0xff]
    %v486 = vld [vmem:[#allocation11 + $0x10c] sm:$0xff]
    %v487 = vld [vmem:[#allocation11 + $0x114] sm:$0xf]
    %v488 = vld [vmem:[#allocation11 + $0x118] sm:$0xff]
    %v489 = vld [vmem:[#allocation11 + $0x120] sm:$0xff]
    %v490 = vld [vmem:[#allocation11 + $0x128] sm:$0xff]
    %v491 = vld [vmem:[#allocation11 + $0x130] sm:$0xf]
    %v492 = vld [vmem:[#allocation11 + $0x134] sm:$0xff]
    %v493 = vld [vmem:[#allocation11 + $0x13c] sm:$0xff]
    %v494 = vld [vmem:[#allocation11 + $0x144] sm:$0xff]
    %v495 = vld [vmem:[#allocation11 + $0x14c] sm:$0xf]
    %v496 = vld [vmem:[#allocation11 + $0x150] sm:$0xff]
    %v497 = vld [vmem:[#allocation11 + $0x158] sm:$0xff]
    %v498 = vld [vmem:[#allocation11 + $0x160] sm:$0xff]
    %v499 = vld [vmem:[#allocation11 + $0x168] sm:$0xf]
    %v500 = vld [vmem:[#allocation11 + $0x16c] sm:$0xff]
    %v501 = vld [vmem:[#allocation11 + $0x174] sm:$0xff]
    %v502 = vld [vmem:[#allocation11 + $0x17c] sm:$0xff]
    %v503 = vld [vmem:[#allocation11 + $0x184] sm:$0xf]
    %v504 = vld [vmem:[#allocation11 + $0x188] sm:$0xff]
    %v505 = vld [vmem:[#allocation11 + $0x190] sm:$0xff]
    %v506 = vld [vmem:[#allocation11 + $0x198] sm:$0xff]
    %v507 = vld [vmem:[#allocation11 + $0x1a0] sm:$0xf]
    %v508 = vld [vmem:[#allocation11 + $0x1a4] sm:$0xff]
    %v509 = vld [vmem:[#allocation11 + $0x1ac] sm:$0xff]
    %v510 = vld [vmem:[#allocation11 + $0x1b4] sm:$0xff]
    %v511 = vld [vmem:[#allocation11 + $0x1bc] sm:$0xf]
    %v512 = vld [vmem:[%s8] sm:$0xff]
    %v514 = vlaneseq
    %v515 = vshrl.u32 %v514, 7
    %v516 = vsub.s32 0, %v515
    %v517 = vrot.slane %v512, %v516
    %v518 = vlaneseq
    %v519 = vshrl.u32 %v518, 7
    %v520 = vsub.s32 1, %v519
    %v521 = vrot.slane %v512, %v520
    %v522 = vlaneseq
    %v523 = vshrl.u32 %v522, 7
    %v524 = vsub.s32 2, %v523
    %v525 = vrot.slane %v512, %v524
    %v526 = vlaneseq
    %v527 = vshrl.u32 %v526, 7
    %v528 = vsub.s32 3, %v527
    %v529 = vrot.slane %v512, %v528
    %v530 = vlaneseq
    %v531 = vshrl.u32 %v530, 7
    %v532 = vsub.s32 4, %v531
    %v533 = vrot.slane %v512, %v532
    %v534 = vlaneseq
    %v535 = vshrl.u32 %v534, 7
    %v536 = vsub.s32 5, %v535
    %v537 = vrot.slane %v512, %v536
    %v538 = vlaneseq
    %v539 = vshrl.u32 %v538, 7
    %v540 = vsub.s32 6, %v539
    %v541 = vrot.slane %v512, %v540
    %v613 = vunpack.c.l.b16 %v448
    %v614 = vunpack.c.h.b16 %v448
    %v615 = vunpack.c.l.b16 %v449
    %v616 = vunpack.c.h.b16 %v449
    %v617 = vunpack.c.l.b16 %v450
    %v618 = vunpack.c.h.b16 %v450
    %v619 = vunpack.c.l.b16 %v451
    %v620 = vunpack.c.l.b16 %v452
    %v621 = vunpack.c.h.b16 %v452
    %v622 = vunpack.c.l.b16 %v453
    %v623 = vunpack.c.h.b16 %v453
    %v624 = vunpack.c.l.b16 %v454
    %v625 = vunpack.c.h.b16 %v454
    %v626 = vunpack.c.l.b16 %v455
    %v627 = vunpack.c.l.b16 %v456
    %v628 = vunpack.c.h.b16 %v456
    %v629 = vunpack.c.l.b16 %v457
    %v630 = vunpack.c.h.b16 %v457
    %v631 = vunpack.c.l.b16 %v458
    %v632 = vunpack.c.h.b16 %v458
    %v633 = vunpack.c.l.b16 %v459
    %v634 = vunpack.c.l.b16 %v460
    %v635 = vunpack.c.h.b16 %v460
    %v636 = vunpack.c.l.b16 %v461
    %v637 = vunpack.c.h.b16 %v461
    %v638 = vunpack.c.l.b16 %v462
    %v639 = vunpack.c.h.b16 %v462
    %v640 = vunpack.c.l.b16 %v463
    %v641 = vunpack.c.l.b16 %v464
    %v642 = vunpack.c.h.b16 %v464
    %v643 = vunpack.c.l.b16 %v465
    %v644 = vunpack.c.h.b16 %v465
    %v645 = vunpack.c.l.b16 %v466
    %v646 = vunpack.c.h.b16 %v466
    %v647 = vunpack.c.l.b16 %v467
    %v648 = vunpack.c.l.b16 %v468
    %v649 = vunpack.c.h.b16 %v468
    %v650 = vunpack.c.l.b16 %v469
    %v651 = vunpack.c.h.b16 %v469
    %v652 = vunpack.c.l.b16 %v470
    %v653 = vunpack.c.h.b16 %v470
    %v654 = vunpack.c.l.b16 %v471
    %v655 = vunpack.c.l.b16 %v472
    %v656 = vunpack.c.h.b16 %v472
    %v657 = vunpack.c.l.b16 %v473
    %v658 = vunpack.c.h.b16 %v473
    %v659 = vunpack.c.l.b16 %v474
    %v660 = vunpack.c.h.b16 %v474
    %v661 = vunpack.c.l.b16 %v475
    %v662 = vunpack.c.l.b16 %v476
    %v663 = vunpack.c.h.b16 %v476
    %v664 = vunpack.c.l.b16 %v477
    %v665 = vunpack.c.h.b16 %v477
    %v666 = vunpack.c.l.b16 %v478
    %v667 = vunpack.c.h.b16 %v478
    %v668 = vunpack.c.l.b16 %v479
    %v669 = vunpack.c.l.b16 %v480
    %v670 = vunpack.c.h.b16 %v480
    %v671 = vunpack.c.l.b16 %v481
    %v672 = vunpack.c.h.b16 %v481
    %v673 = vunpack.c.l.b16 %v482
    %v674 = vunpack.c.h.b16 %v482
    %v675 = vunpack.c.l.b16 %v483
    %v676 = vunpack.c.l.b16 %v484
    %v677 = vunpack.c.h.b16 %v484
    %v678 = vunpack.c.l.b16 %v485
    %v679 = vunpack.c.h.b16 %v485
    %v680 = vunpack.c.l.b16 %v486
    %v681 = vunpack.c.h.b16 %v486
    %v682 = vunpack.c.l.b16 %v487
    %v683 = vunpack.c.l.b16 %v488
    %v684 = vunpack.c.h.b16 %v488
    %v685 = vunpack.c.l.b16 %v489
    %v686 = vunpack.c.h.b16 %v489
    %v687 = vunpack.c.l.b16 %v490
    %v688 = vunpack.c.h.b16 %v490
    %v689 = vunpack.c.l.b16 %v491
    %v690 = vunpack.c.l.b16 %v492
    %v691 = vunpack.c.h.b16 %v492
    %v692 = vunpack.c.l.b16 %v493
    %v693 = vunpack.c.h.b16 %v493
    %v694 = vunpack.c.l.b16 %v494
    %v695 = vunpack.c.h.b16 %v494
    %v696 = vunpack.c.l.b16 %v495
    %v697 = vunpack.c.l.b16 %v496
    %v698 = vunpack.c.h.b16 %v496
    %v699 = vunpack.c.l.b16 %v497
    %v700 = vunpack.c.h.b16 %v497
    %v701 = vunpack.c.l.b16 %v498
    %v702 = vunpack.c.h.b16 %v498
    %v703 = vunpack.c.l.b16 %v499
    %v704 = vunpack.c.l.b16 %v500
    %v705 = vunpack.c.h.b16 %v500
    %v706 = vunpack.c.l.b16 %v501
    %v707 = vunpack.c.h.b16 %v501
    %v708 = vunpack.c.l.b16 %v502
    %v709 = vunpack.c.h.b16 %v502
    %v710 = vunpack.c.l.b16 %v503
    %v711 = vunpack.c.l.b16 %v504
    %v712 = vunpack.c.h.b16 %v504
    %v713 = vunpack.c.l.b16 %v505
    %v714 = vunpack.c.h.b16 %v505
    %v715 = vunpack.c.l.b16 %v506
    %v716 = vunpack.c.h.b16 %v506
    %v717 = vunpack.c.l.b16 %v507
    %v718 = vunpack.c.l.b16 %v508
    %v719 = vunpack.c.h.b16 %v508
    %v720 = vunpack.c.l.b16 %v509
    %v721 = vunpack.c.h.b16 %v509
    %v722 = vunpack.c.l.b16 %v510
    %v723 = vunpack.c.h.b16 %v510
    %v724 = vunpack.c.l.b16 %v511
    %v725 = vpack.c.b16 %v620, %v613
    %v726 = vpack.c.b16 %v621, %v614
    %v727 = vpack.c.b16 %v622, %v615
    %v728 = vpack.c.b16 %v623, %v616
    %v729 = vpack.c.b16 %v624, %v617
    %v730 = vpack.c.b16 %v625, %v618
    %v731 = vpack.c.b16 %v626, %v619
    %v732 = vpack.c.b16 %v634, %v627
    %v733 = vpack.c.b16 %v635, %v628
    %v734 = vpack.c.b16 %v636, %v629
    %v735 = vpack.c.b16 %v637, %v630
    %v736 = vpack.c.b16 %v638, %v631
    %v737 = vpack.c.b16 %v639, %v632
    %v738 = vpack.c.b16 %v640, %v633
    %v739 = vpack.c.b16 %v648, %v641
    %v740 = vpack.c.b16 %v649, %v642
    %v741 = vpack.c.b16 %v650, %v643
    %v742 = vpack.c.b16 %v651, %v644
    %v743 = vpack.c.b16 %v652, %v645
    %v744 = vpack.c.b16 %v653, %v646
    %v745 = vpack.c.b16 %v654, %v647
    %v746 = vpack.c.b16 %v662, %v655
    %v747 = vpack.c.b16 %v663, %v656
    %v748 = vpack.c.b16 %v664, %v657
    %v749 = vpack.c.b16 %v665, %v658
    %v750 = vpack.c.b16 %v666, %v659
    %v751 = vpack.c.b16 %v667, %v660
    %v752 = vpack.c.b16 %v668, %v661
    %v753 = vpack.c.b16 %v676, %v669
    %v754 = vpack.c.b16 %v677, %v670
    %v755 = vpack.c.b16 %v678, %v671
    %v756 = vpack.c.b16 %v679, %v672
    %v757 = vpack.c.b16 %v680, %v673
    %v758 = vpack.c.b16 %v681, %v674
    %v759 = vpack.c.b16 %v682, %v675
    %v760 = vpack.c.b16 %v690, %v683
    %v761 = vpack.c.b16 %v691, %v684
    %v762 = vpack.c.b16 %v692, %v685
    %v763 = vpack.c.b16 %v693, %v686
    %v764 = vpack.c.b16 %v694, %v687
    %v765 = vpack.c.b16 %v695, %v688
    %v766 = vpack.c.b16 %v696, %v689
    %v767 = vpack.c.b16 %v704, %v697
    %v768 = vpack.c.b16 %v705, %v698
    %v769 = vpack.c.b16 %v706, %v699
    %v770 = vpack.c.b16 %v707, %v700
    %v771 = vpack.c.b16 %v708, %v701
    %v772 = vpack.c.b16 %v709, %v702
    %v773 = vpack.c.b16 %v710, %v703
    %v774 = vpack.c.b16 %v718, %v711
    %v775 = vpack.c.b16 %v719, %v712
    %v776 = vpack.c.b16 %v720, %v713
    %v777 = vpack.c.b16 %v721, %v714
    %v778 = vpack.c.b16 %v722, %v715
    %v779 = vpack.c.b16 %v723, %v716
    %v780 = vpack.c.b16 %v724, %v717
    %837 = vmatprep.subr.bf16.mxu0 %v775
    %838 = vmatpush1.bf16.msra.mxu0 %v774
    %839 = vmatprep.subr.bf16.mxu0 %v768
    %840 = vmatpush1.bf16.msra.mxu0 %v767
    %841 = vmatprep.subr.bf16.mxu0 %v761
    %842 = vmatpush1.bf16.msra.mxu0 %v760
    %843 = vmatprep.subr.bf16.mxu0 %v754
    %844 = vmatpush1.bf16.msra.mxu0 %v753
    %845 = vmatprep.subr.bf16.mxu0 %v747
    %846 = vmatpush1.bf16.msra.mxu0 %v746
    %847 = vmatprep.subr.bf16.mxu0 %v740
    %848 = vmatpush1.bf16.msra.mxu0 %v739
    %849 = vmatprep.subr.bf16.mxu0 %v733
    %850 = vmatpush1.bf16.msra.mxu0 %v732
    %851 = vmatprep.subr.bf16.mxu0 %v726
    %852 = vmatpush1.bf16.msra.mxu0 %v725
    %853 = vmatprep.subr.bf16.mxu0 0
    %854 = vmatpush2.bf16.msra.mxu0 0
    %855 = vmatprep.subr.bf16.mxu0 0
    %856 = vmatpush2.bf16.msra.mxu0 0
    %857 = vmatprep.subr.bf16.mxu0 0
    %858 = vmatpush2.bf16.msra.mxu0 0
    %859 = vmatprep.subr.bf16.mxu0 0
    %860 = vmatpush2.bf16.msra.mxu0 0
    %861 = vmatprep.subr.bf16.mxu0 0
    %862 = vmatpush2.bf16.msra.mxu0 0
    %863 = vmatprep.subr.bf16.mxu0 0
    %864 = vmatpush2.bf16.msra.mxu0 0
    %865 = vmatprep.subr.bf16.mxu0 0
    %866 = vmatpush2.bf16.msra.mxu0 0
    %867 = vmatprep.subr.bf16.mxu0 0
    %868 = vmatpush2.bf16.msra.mxu0 0
    %869 = vmatprep.mubr.bf16.mxu0 0
    %870 = vmatmul.mubr.bf16.gmra.mxu0 %v447
    %v871 = vpop.f32.mrf.mxu0
    %v872 = vadd.f32 %v517, %v871
    %v873 = vpop.f32.mrf.mxu0
    %v874 = vadd.f32 %v521, %v873
    %v875 = vpop.f32.mrf.mxu0
    %v876 = vpop.f32.mrf.mxu0
    %877 = vdwg.mxu0
    %878 = vmatprep.subr.bf16.mxu0 %v777
    %879 = vmatpush1.bf16.msra.mxu0 %v776
    %880 = vmatprep.subr.bf16.mxu0 %v770
    %881 = vmatpush1.bf16.msra.mxu0 %v769
    %882 = vmatprep.subr.bf16.mxu0 %v763
    %883 = vmatpush1.bf16.msra.mxu0 %v762
    %884 = vmatprep.subr.bf16.mxu0 %v756
    %885 = vmatpush1.bf16.msra.mxu0 %v755
    %886 = vmatprep.subr.bf16.mxu0 %v749
    %887 = vmatpush1.bf16.msra.mxu0 %v748
    %888 = vmatprep.subr.bf16.mxu0 %v742
    %889 = vmatpush1.bf16.msra.mxu0 %v741
    %890 = vmatprep.subr.bf16.mxu0 %v735
    %891 = vmatpush1.bf16.msra.mxu0 %v734
    %892 = vmatprep.subr.bf16.mxu0 %v728
    %893 = vmatpush1.bf16.msra.mxu0 %v727
    %894 = vmatprep.subr.bf16.mxu0 0
    %895 = vmatpush2.bf16.msra.mxu0 0
    %896 = vmatprep.subr.bf16.mxu0 0
    %897 = vmatpush2.bf16.msra.mxu0 0
    %898 = vmatprep.subr.bf16.mxu0 0
    %899 = vmatpush2.bf16.msra.mxu0 0
    %900 = vmatprep.subr.bf16.mxu0 0
    %901 = vmatpush2.bf16.msra.mxu0 0
    %902 = vmatprep.subr.bf16.mxu0 0
    %903 = vmatpush2.bf16.msra.mxu0 0
    %904 = vmatprep.subr.bf16.mxu0 0
    %905 = vmatpush2.bf16.msra.mxu0 0
    %906 = vmatprep.subr.bf16.mxu0 0
    %907 = vmatpush2.bf16.msra.mxu0 0
    %908 = vmatprep.subr.bf16.mxu0 0
    %909 = vmatpush2.bf16.msra.mxu0 0
    %910 = vmatprep.mubr.bf16.mxu0 0
    %911 = vmatmul.mubr.bf16.gmra.mxu0 %v447
    %v912 = vpop.f32.mrf.mxu0
    %v913 = vadd.f32 %v525, %v912
    %v914 = vpop.f32.mrf.mxu0
    %v915 = vadd.f32 %v529, %v914
    %v916 = vpop.f32.mrf.mxu0
    %v917 = vpop.f32.mrf.mxu0
    %918 = vdwg.mxu0
    %919 = vmatprep.subr.bf16.mxu0 %v779
    %920 = vmatpush1.bf16.msra.mxu0 %v778
    %921 = vmatprep.subr.bf16.mxu0 %v772
    %922 = vmatpush1.bf16.msra.mxu0 %v771
    %923 = vmatprep.subr.bf16.mxu0 %v765
    %924 = vmatpush1.bf16.msra.mxu0 %v764
    %925 = vmatprep.subr.bf16.mxu0 %v758
    %926 = vmatpush1.bf16.msra.mxu0 %v757
    %927 = vmatprep.subr.bf16.mxu0 %v751
    %928 = vmatpush1.bf16.msra.mxu0 %v750
    %929 = vmatprep.subr.bf16.mxu0 %v744
    %930 = vmatpush1.bf16.msra.mxu0 %v743
    %931 = vmatprep.subr.bf16.mxu0 %v737
    %932 = vmatpush1.bf16.msra.mxu0 %v736
    %933 = vmatprep.subr.bf16.mxu0 %v730
    %934 = vmatpush1.bf16.msra.mxu0 %v729
    %935 = vmatprep.subr.bf16.mxu0 0
    %936 = vmatpush2.bf16.msra.mxu0 0
    %937 = vmatprep.subr.bf16.mxu0 0
    %938 = vmatpush2.bf16.msra.mxu0 0
    %939 = vmatprep.subr.bf16.mxu0 0
    %940 = vmatpush2.bf16.msra.mxu0 0
    %941 = vmatprep.subr.bf16.mxu0 0
    %942 = vmatpush2.bf16.msra.mxu0 0
    %943 = vmatprep.subr.bf16.mxu0 0
    %944 = vmatpush2.bf16.msra.mxu0 0
    %945 = vmatprep.subr.bf16.mxu0 0
    %946 = vmatpush2.bf16.msra.mxu0 0
    %947 = vmatprep.subr.bf16.mxu0 0
    %948 = vmatpush2.bf16.msra.mxu0 0
    %949 = vmatprep.subr.bf16.mxu0 0
    %950 = vmatpush2.bf16.msra.mxu0 0
    %951 = vmatprep.mubr.bf16.mxu0 0
    %952 = vmatmul.mubr.bf16.gmra.mxu0 %v447
    %v953 = vpop.f32.mrf.mxu0
    %v954 = vadd.f32 %v533, %v953
    %v955 = vpop.f32.mrf.mxu0
    %v956 = vadd.f32 %v537, %v955
    %v957 = vpop.f32.mrf.mxu0
    %v958 = vpop.f32.mrf.mxu0
    %959 = vdwg.mxu0
    %960 = vmatprep.subr.bf16.mxu0 0
    %961 = vmatpush1.bf16.msra.mxu0 %v780
    %962 = vmatprep.subr.bf16.mxu0 0
    %963 = vmatpush1.bf16.msra.mxu0 %v773
    %964 = vmatprep.subr.bf16.mxu0 0
    %965 = vmatpush1.bf16.msra.mxu0 %v766
    %966 = vmatprep.subr.bf16.mxu0 0
    %967 = vmatpush1.bf16.msra.mxu0 %v759
    %968 = vmatprep.subr.bf16.mxu0 0
    %969 = vmatpush1.bf16.msra.mxu0 %v752
    %970 = vmatprep.subr.bf16.mxu0 0
    %971 = vmatpush1.bf16.msra.mxu0 %v745
    %972 = vmatprep.subr.bf16.mxu0 0
    %973 = vmatpush1.bf16.msra.mxu0 %v738
    %974 = vmatprep.subr.bf16.mxu0 0
    %975 = vmatpush1.bf16.msra.mxu0 %v731
    %976 = vmatprep.subr.bf16.mxu0 0
    %977 = vmatpush2.bf16.msra.mxu0 0
    %978 = vmatprep.subr.bf16.mxu0 0
    %979 = vmatpush2.bf16.msra.mxu0 0
    %980 = vmatprep.subr.bf16.mxu0 0
    %981 = vmatpush2.bf16.msra.mxu0 0
    %982 = vmatprep.subr.bf16.mxu0 0
    %983 = vmatpush2.bf16.msra.mxu0 0
    %984 = vmatprep.subr.bf16.mxu0 0
    %985 = vmatpush2.bf16.msra.mxu0 0
    %986 = vmatprep.subr.bf16.mxu0 0
    %987 = vmatpush2.bf16.msra.mxu0 0
    %988 = vmatprep.subr.bf16.mxu0 0
    %989 = vmatpush2.bf16.msra.mxu0 0
    %990 = vmatprep.subr.bf16.mxu0 0
    %991 = vmatpush2.bf16.msra.mxu0 0
    %992 = vmatprep.mubr.bf16.mxu0 0
    %993 = vmatmul.mubr.bf16.gmra.mxu0 %v447
    %v994 = vpop.f32.mrf.mxu0
    %v995 = vadd.f32 %v541, %v994
    %v996 = vpop.f32.mrf.mxu0
    %v997 = vpop.f32.mrf.mxu0
    %v998 = vpop.f32.mrf.mxu0
    %999 = vdwg.mxu0
    %v1000 = vpack.c.bf16 %v872, %v872
    %v1001 = vpack.c.bf16 %v874, %v874
    %v1002 = vpack.c.bf16 %v913, %v913
    %v1003 = vpack.c.bf16 %v915, %v915
    %v1004 = vpack.c.bf16 %v954, %v954
    %v1005 = vpack.c.bf16 %v956, %v956
    %v1006 = vpack.c.bf16 %v995, %v995
    %v1007 = vtanh.bf16.pop %v1000
    %v1008 = vtanh.bf16.pop %v1001
    %v1009 = vtanh.bf16.pop %v1002
    %v1010 = vtanh.bf16.pop %v1003
    %v1011 = vtanh.bf16.pop %v1004
    %v1012 = vtanh.bf16.pop %v1005
    %v1013 = vtanh.bf16.pop %v1006
    %v1021 = vunpack.c.l.b16 %v1007
    %v1022 = vunpack.c.l.b16 %v1008
    %v1023 = vunpack.c.l.b16 %v1009
    %v1024 = vunpack.c.l.b16 %v1010
    %v1025 = vunpack.c.l.b16 %v1011
    %v1026 = vunpack.c.l.b16 %v1012
    %v1027 = vunpack.c.l.b16 %v1013
    %v1028 = vpack.c.b16 %v1022, %v1021
    %v1029 = vpack.c.b16 %v1024, %v1023
    %v1030 = vpack.c.b16 %v1026, %v1025
    %v1031 = vpack.c.b16 %v1027, %v1027
    %1036 = vst [vmem:[#allocation12] sm:$0xff] %v1028
    %1037 = vst [vmem:[#allocation12 + $0x8] sm:$0xff] %v1029
    %1038 = vst [vmem:[#allocation12 + $0x10] sm:$0xff] %v1030
    %vm1039 = vcmask 125952
    %1040 = vst.msk [vmem:[#allocation12 + $0x18] sm:$0xf] %vm1039, %v1031
    // Predicated region
    $region58: #{tpu_custom_call.1} parent=1 // pred_check
      _
    $region59: #{tpu_custom_call.1} parent=1 // pred_check_branch
      %1042 = sbr.rel (0) target = $region61
    $region60: #{tpu_custom_call.1} parent=1 // pred_region
      %s1044 = ssub.s32 448, 448
      %1045 = vsyncadd [#allocation5], %s1044
      %s1047 = sshll.u32 [#allocation12], 4
      %s1048 = int_to_ptr.vmem [resolvable:$true] %s1047
      %1050 = dma.vmem_to_hbm [thread:$0]  %s1048, 448, %s9, [#allocation5]
    $region61: #{tpu_custom_call.1} parent=1 // pred_fallthru
      _
    // Predicated region
    $region62: #{tpu_custom_call.1} parent=1 // pred_check
      _
    $region63: #{tpu_custom_call.1} parent=1 // pred_check_branch
      %1052 = sbr.rel (0) target = $region65
    $region64: #{tpu_custom_call.1} parent=1 // pred_region
      %1053 = dma.done [#allocation5], 448
    $region65: #{tpu_custom_call.1} parent=1 // pred_fallthru
      _
    %1054 = vsyncpa [#allocation4], 1
    %1055 = vsyncpa [#allocation7], 1
    %1056 = vsyncpa [#allocation10], 1
    %1057 = vsyncpa [#allocation5], 1

</llo_original>
